<compile_context>
chip_gen: v5e
topology: v5e:2x2
jax: 0.10.0
libtpu: 0.0.40
codegen_flags: <defaults>
</compile_context>

<pallas_src>
import functools

import jax
import jax.numpy as jnp
from jax.experimental import pallas as pl
from jax.experimental.pallas import tpu as pltpu


def _round_up(x: int, m: int) -> int:
    return ((x + m - 1) // m) * m


def _vmem_capacity_bytes() -> int:
    """Generation-aware VMEM capacity (64 MiB/TC on v7x, 128 MiB on v5e/v6e)."""
    try:
        info = pltpu.get_tpu_info()
        cap = getattr(info, "vmem_capacity_bytes", None)
        if cap:
            return int(cap)
    except Exception:
        pass
    return 64 << 20  # conservative fallback (v7x per-TC)


def _linear_kernel(x_ref, w_ref, b_ref, o_ref):
    # x_ref: (TILE_M, IN), w_ref: (IN, D), b_ref: (1, D), o_ref: (TILE_M, D)
    acc = jnp.dot(x_ref[...], w_ref[...], preferred_element_type=jnp.float32)
    o_ref[...] = (acc + b_ref[...]).astype(o_ref.dtype)


def _choose_tile_m(m, d_model, in_itemsize, out_itemsize, vmem_cap, tile_m_hint):
    d_vmem = _round_up(d_model, 128)
    m8 = _round_up(max(m, 1), 8)

    # Double-buffered per-row VMEM bytes: the (TILE_M, 4) x tile is lane-padded
    # to 128 lanes in VMEM; the output tile is lane-padded to d_vmem.
    per_row = 2 * (128 * in_itemsize + d_vmem * out_itemsize)
    resident = 4 * (8 * d_vmem * 4)          # W + bias (padded), double-buffered
    budget = max(vmem_cap - (16 << 20), 8 << 20)
    cap_rows = max(8, ((budget - resident) // per_row) // 8 * 8)

    if tile_m_hint is not None:
        tile = _round_up(int(tile_m_hint), 8)
    else:
        # Target >= ~4 MiB of HBM output writeback per grid step so the
        # ~0.35 us fixed per-step cost stays <10% of the step.
        tile = _round_up(max((4 << 20) // max(d_model * out_itemsize, 1), 8), 8)
    tile = max(8, min(tile, cap_rows, m8))

    # v7x megacore: avoid collapsing to grid=1 when splitting the M axis still
    # gives each TensorCore >= ~512 KiB of output per step.
    if tile >= m8 and m8 >= 16:
        half = _round_up((m8 + 1) // 2, 8)
        if half * d_model * out_itemsize >= (512 << 10):
            tile = max(8, min(half, cap_rows))
    return tile


@functools.partial(jax.jit, static_argnames=("tile_m", "out_dtype"))
def observation_encoder_forward(x, weight, bias, *, tile_m=None, out_dtype=None):
    """y = x @ weight.T + bias.

    x: (..., in_features)
    weight: (d_model, in_features)
    bias: (d_model,)
    returns: (..., d_model) with dtype `out_dtype` (default: x.dtype).
    """
    *lead, in_features = x.shape
    d_model, in_w = weight.shape
    assert in_features == in_w, (in_features, in_w)
    out_dtype = jnp.dtype(x.dtype if out_dtype is None else out_dtype)

    x2d = x.reshape(-1, in_features)             # (M, IN)
    m = x2d.shape[0]

    w_t = weight.T                               # (IN, D) — tiny, stays resident in VMEM
    b2d = bias[None, :]                          # (1, D)

    in_itemsize = jnp.dtype(x.dtype).itemsize
    out_itemsize = out_dtype.itemsize
    vmem_cap = _vmem_capacity_bytes()

    eff_tile_m = _choose_tile_m(m, d_model, in_itemsize, out_itemsize, vmem_cap, tile_m)
    grid_m = pl.cdiv(m, eff_tile_m)

    d_vmem = _round_up(d_model, 128)
    resident = 4 * (8 * d_vmem * 4)
    footprint = 2 * eff_tile_m * (128 * in_itemsize + d_vmem * out_itemsize) + resident
    vmem_limit = int(min(max(footprint + (2 << 20), 16 << 20), vmem_cap - (4 << 20)))

    cost = pl.CostEstimate(
        flops=2 * m * in_features * d_model,
        transcendentals=0,
        bytes_accessed=(in_itemsize * m * in_features
                        + out_itemsize * m * d_model
                        + 4 * (d_model * in_features + d_model)),
    )

    out = pl.pallas_call(
        _linear_kernel,
        out_shape=jax.ShapeDtypeStruct((m, d_model), out_dtype),
        grid_spec=pltpu.PrefetchScalarGridSpec(
            num_scalar_prefetch=0,
            grid=(grid_m,),
            in_specs=[
                pl.BlockSpec((eff_tile_m, in_features), lambda i: (i, 0)),
                pl.BlockSpec((in_features, d_model), lambda i: (0, 0)),
                pl.BlockSpec((1, d_model), lambda i: (0, 0)),
            ],
            out_specs=pl.BlockSpec((eff_tile_m, d_model), lambda i: (i, 0)),
        ),
        compiler_params=pltpu.CompilerParams(
            dimension_semantics=("parallel",),    # shard M across TCs on v7x
            vmem_limit_bytes=vmem_limit,
        ),
        cost_estimate=cost,
    )(x2d, w_t, b2d)

    return out.reshape(*lead, d_model)


if __name__ == "__main__":
    d_model = 32
    batch, seq, in_features = 2, 8, 4

    key = jax.random.PRNGKey(0)
    k_x, k_w, k_b = jax.random.split(key, 3)

    # Deterministic init mimicking nn.Linear default: U(-1/sqrt(in), 1/sqrt(in))
    bound = 1.0 / (in_features ** 0.5)
    weight = jax.random.uniform(
        k_w, (d_model, in_features), jnp.float32, minval=-bound, maxval=bound)
    bias = jax.random.uniform(
        k_b, (d_model,), jnp.float32, minval=-bound, maxval=bound)
    x = jax.random.normal(k_x, (batch, seq, in_features), jnp.float32)

    y = jax.block_until_ready(observation_encoder_forward(x, weight, bias))
    y_ref = x @ weight.T + bias
    assert y.shape == (batch, seq, d_model)
    assert y.dtype == x.dtype
    assert jnp.allclose(y, y_ref, atol=1e-5, rtol=1e-5)

    # Non-tile-multiple M and d_model not a multiple of 128, multi-step grid:
    # exercises ragged last block + masked stores.
    k2x, k2w, k2b = jax.random.split(jax.random.PRNGKey(1), 3)
    d2 = 96
    w2 = jax.random.uniform(k2w, (d2, in_features), jnp.float32, minval=-0.5, maxval=0.5)
    b2 = jax.random.uniform(k2b, (d2,), jnp.float32, minval=-0.5, maxval=0.5)
    x2 = jax.random.normal(k2x, (3, 37, in_features), jnp.float32)
    y2 = jax.block_until_ready(observation_encoder_forward(x2, w2, b2, tile_m=64))
    y2_ref = x2 @ w2.T + b2
    assert y2.shape == (3, 37, d2)
    assert jnp.allclose(y2, y2_ref, atol=1e-5, rtol=1e-5)

    # bf16 output path (store-side cast, f32 MXU accumulation).
    y3 = jax.block_until_ready(
        observation_encoder_forward(x, weight, bias, out_dtype=jnp.bfloat16))
    assert y3.dtype == jnp.bfloat16
    assert jnp.allclose(y3.astype(jnp.float32), y_ref, atol=2e-2, rtol=2e-2)

    print("KERNEL_OK")
</pallas_src>

<mosaic_0001>
module attributes {stable_mosaic.version = 11 : i64} {
  func.func @_linear_kernel(%arg0: i32, %arg1: memref<16x4xf32, #tpu.memory_space<vmem>>, %arg2: memref<4x32xf32, #tpu.memory_space<vmem>>, %arg3: memref<1x32xf32, #tpu.memory_space<vmem>>, %arg4: memref<16x32xf32, #tpu.memory_space<vmem>>) attributes {dimension_semantics = [#tpu.dimension_semantics<parallel>], iteration_bounds = array<i64: 1>, scalar_prefetch = 0 : i64, scratch_operands = 0 : i64, tpu.core_type = #tpu.core_type<tc>, window_params = [{transform_indices = @transform_0, window_bounds = array<i64: 16, 4>}, {pipeline_mode = #tpu.pipeline_mode<synchronous>, transform_indices = @transform_1, window_bounds = array<i64: 4, 32>}, {pipeline_mode = #tpu.pipeline_mode<synchronous>, transform_indices = @transform_2, window_bounds = array<i64: 1, 32>}, {transform_indices = @transform_3, window_bounds = array<i64: 16, 32>}]} {
    %c0 = arith.constant 0 : index
    %c0_0 = arith.constant 0 : index
    %0 = vector.load %arg1[%c0, %c0_0] : memref<16x4xf32, #tpu.memory_space<vmem>>, vector<16x4xf32>
    %c0_1 = arith.constant 0 : index
    %c0_2 = arith.constant 0 : index
    %1 = vector.load %arg2[%c0_1, %c0_2] : memref<4x32xf32, #tpu.memory_space<vmem>>, vector<4x32xf32>
    %cst = arith.constant dense<0.000000e+00> : vector<16x32xf32>
    %2 = tpu.matmul %0, %1, %cst {dimension_numbers = #tpu.dot_dimension_numbers<[1], [0], [0], [1], [0, 0, 1, 1], [], []>} : vector<16x4xf32>, vector<4x32xf32>, vector<16x32xf32> -> vector<16x32xf32>
    %c0_3 = arith.constant 0 : index
    %c0_4 = arith.constant 0 : index
    %3 = vector.load %arg3[%c0_3, %c0_4] : memref<1x32xf32, #tpu.memory_space<vmem>>, vector<1x32xf32>
    %4 = vector.broadcast %3 : vector<1x32xf32> to vector<16x32xf32>
    %5 = arith.addf %2, %4 : vector<16x32xf32>
    %c0_5 = arith.constant 0 : index
    %c0_6 = arith.constant 0 : index
    %6 = vector.load %arg4[%c0_5, %c0_6] : memref<16x32xf32, #tpu.memory_space<vmem>>, vector<16x32xf32>
    tpu.vector_store %arg4[%c0_5, %c0_6], %5 {strides = array<i32>} : memref<16x32xf32, #tpu.memory_space<vmem>>, vector<16x32xf32>,
    return
  }
  func.func @transform_0(%arg0: i32) -> (i32, i32) {
    %c0_i32 = arith.constant 0 : i32
    %c0_i32_0 = arith.constant 0 : i32
    return %arg0, %c0_i32 : i32, i32
  }
  func.func @transform_1(%arg0: i32) -> (i32, i32) {
    %c0_i32 = arith.constant 0 : i32
    %c0_i32_0 = arith.constant 0 : i32
    %c0_i32_1 = arith.constant 0 : i32
    return %c0_i32, %c0_i32_0 : i32, i32
  }
  func.func @transform_2(%arg0: i32) -> (i32, i32) {
    %c0_i32 = arith.constant 0 : i32
    %c0_i32_0 = arith.constant 0 : i32
    %c0_i32_1 = arith.constant 0 : i32
    return %c0_i32, %c0_i32_0 : i32, i32
  }
  func.func @transform_3(%arg0: i32) -> (i32, i32) {
    %c0_i32 = arith.constant 0 : i32
    %c0_i32_0 = arith.constant 0 : i32
    return %arg0, %c0_i32 : i32, i32
  }
}

</mosaic_0001>

<llo_original>
// kernel: observation_encoder_forward.1
$region0: #{observation_encoder_forward.1}
  #allocation0 [shape = 'u32[]', space=smem, size = 0x4, offset = 0x4, fixed_abs, tag = 'smem constant byte address 0x4 - core index']
  #allocation1 [shape = 'u32[72,128]{1,0:T(1,128)}', space=vmem, size = 0x9000, scoped, tag = 'internal scratch']
  %s0 = inlined_call_operand.vmem [shape: f32[16,4], index: 0, kind: input, shape index: {}]
  %s1 = inlined_call_operand.vmem [shape: f32[4,32], index: 1, kind: input, shape index: {}]
  %s2 = inlined_call_operand.vmem [shape: f32[1,32], index: 2, kind: input, shape index: {}]
  %s3 = inlined_call_operand.hbm [shape: f32[16,32], index: 3, kind: output, shape index: {}]
  %s4 = sld [smem:[#allocation0]]
  $region22: #{observation_encoder_forward.1} parent=0
    _
  %s6 = ssub.s32 1, %s4
  %s7 = scalar_select 0, %s6, %s4
  $region1: #{observation_encoder_forward.1} parent=0
    #allocation2 [shape = 'u8[8192]{0}', space=vmem, size = 0x2000, scoped, tag = 'output window, operand 0, single buffered']
    #allocation3 [shape = 's32[1]{0}', space=sflag, size = 0x4, scoped, tag = 'scoped memory for observation_encoder_forward.1']
    %8 = vsyncpa [#allocation3], 0
    // Predicated region
    $region2: #{observation_encoder_forward.1} parent=1 // pred_check
      _
    $region3: #{observation_encoder_forward.1} parent=1 // pred_check_branch
      %10 = sbr.rel (0) target = $region5
    $region4: #{observation_encoder_forward.1} parent=1 // pred_region
      _
    $region5: #{observation_encoder_forward.1} parent=1 // pred_fallthru
      _
    // Predicated region
    $region6: #{observation_encoder_forward.1} parent=1 // pred_check
      _
    $region7: #{observation_encoder_forward.1} parent=1 // pred_check_branch
      %12 = sbr.rel (0) target = $region9
    $region8: #{observation_encoder_forward.1} parent=1 // pred_region
      _
    $region9: #{observation_encoder_forward.1} parent=1 // pred_fallthru
      _
    // Predicated region
    $region10: #{observation_encoder_forward.1} parent=1 // pred_check
      _
    $region11: #{observation_encoder_forward.1} parent=1 // pred_check_branch
      %14 = sbr.rel (0) target = $region13
    $region12: #{observation_encoder_forward.1} parent=1 // pred_region
      _
    $region13: #{observation_encoder_forward.1} parent=1 // pred_fallthru
      _
    %v15 = vld [vmem:[%s0] sm:$0xff]
    %v16 = vld [vmem:[%s0 + $0x8] sm:$0xff]
    %v17 = vld [vmem:[%s1] sm:$0xf]
    %v18 = vld [vmem:[%s2] sm:$0x1]
    %v20 = vperm.slane %v18, 0
    %vm22 = vcmask 31744
    %v24 = vsel %vm22, %v15, 0
    %v27 = vsel %vm22, %v16, 0
    %vm29 = vcmask 1043456
    %v31 = vsel %vm29, %v17, 0
    %33 = vmatpush.msra.mxu0 0.0
    %34 = vmatpush.msra.mxu0 0.0
    %35 = vmatpush.msra.mxu0 0.0
    %36 = vmatpush.msra.mxu0 0.0
    %37 = vmatpush.msra.mxu0 0.0
    %38 = vmatpush.msra.mxu0 0.0
    %39 = vmatpush.msra.mxu0 0.0
    %40 = vmatpush.msra.mxu0 0.0
    %41 = vmatpush.msra.mxu0 0.0
    %42 = vmatpush.msra.mxu0 0.0
    %43 = vmatpush.msra.mxu0 0.0
    %44 = vmatpush.msra.mxu0 0.0
    %45 = vmatpush.msra.mxu0 0.0
    %46 = vmatpush.msra.mxu0 0.0
    %47 = vmatpush.msra.mxu0 0.0
    %48 = vmatpush.msra.mxu0 %v31
    %49 = vmatmul.f32.gmra.mxu0 %v24
    %v50 = vpop.f32.mrf.mxu0
    %v51 = vadd.f32 %v20, %v50
    %52 = vmatmul.f32.gmra.mxu0 %v27
    %v53 = vpop.f32.mrf.mxu0
    %v54 = vadd.f32 %v20, %v53
    %55 = vdwg.mxu0
    %vm56 = vcmask 261120
    %57 = vst.msk [vmem:[#allocation2] sm:$0xff] %vm56, %v51
    %58 = vst.msk [vmem:[#allocation2 + $0x8] sm:$0xff] %vm56, %v54
    // Predicated region
    $region14: #{observation_encoder_forward.1} parent=1 // pred_check
      _
    $region15: #{observation_encoder_forward.1} parent=1 // pred_check_branch
      %60 = sbr.rel (0) target = $region17
    $region16: #{observation_encoder_forward.1} parent=1 // pred_region
      %62 = vsyncadd [#allocation3], 0
      %s63 = sshll.u32 [#allocation2], 4
      %s64 = int_to_ptr.vmem [resolvable:$true] %s63
      %s65 = sshll.u32 %s3, 4
      %s66 = int_to_ptr.hbm [resolvable:$true] %s65
      %71 = dma.vmem_to_hbm [thread:$0]  %s64, 256, %s66, [#allocation3], 128, 128, 8
    $region17: #{observation_encoder_forward.1} parent=1 // pred_fallthru
      _
    // Predicated region
    $region18: #{observation_encoder_forward.1} parent=1 // pred_check
      _
    $region19: #{observation_encoder_forward.1} parent=1 // pred_check_branch
      %73 = sbr.rel (0) target = $region21
    $region20: #{observation_encoder_forward.1} parent=1 // pred_region
      %75 = dma.done [#allocation3], 256
    $region21: #{observation_encoder_forward.1} parent=1 // pred_fallthru
      _
    %76 = vsyncpa [#allocation3], 1

</llo_original>
